<compile_context>
chip_gen: v5e
topology: v5e:2x2
jax: 0.10.0
libtpu: 0.0.40
codegen_flags: <defaults>
</compile_context>

<pallas_src>
import functools

import jax
import jax.numpy as jnp
from jax.experimental import pallas as pl
from jax.experimental.pallas import tpu as pltpu


def _round_up(x, m):
    return (x + m - 1) // m * m


def _pick_tm(batch, tm_max):
    """Largest sublane-aligned M tile whose batch-padding waste is small."""
    b8 = _round_up(batch, 8)
    if b8 <= tm_max:
        return b8  # single M block, minimal padding
    for t in (512, 256, 128, 64, 32, 16, 8):
        if t > tm_max:
            continue
        waste = _round_up(batch, t) - batch
        if waste <= max(batch // 8, 8):  # <= ~12.5% padded rows
            return t
    return 8


# --------------------------------------------------------------------------
# Kernels
# --------------------------------------------------------------------------
def _linear_kernel_single_k(x_ref, w_ref, b_ref, o_ref):
    """K fits one tile: o = x @ w + b, no accumulator / predication needed.

    x_ref: (tm, K)  activations (MXU dtype)
    w_ref: (K, tn)  weight, already transposed to (K, N) layout
    b_ref: (1, tn)  bias (f32)
    o_ref: (tm, tn) output
    """
    acc = jnp.dot(x_ref[...], w_ref[...], preferred_element_type=jnp.float32)
    o_ref[...] = (acc + b_ref[...]).astype(o_ref.dtype)


def _linear_kernel_multi_k(x_ref, w_ref, b_ref, o_ref, acc_ref):
    """Large K: accumulate over the trailing ("arbitrary") K grid axis."""
    k = pl.program_id(2)

    @pl.when(k == 0)
    def _():
        acc_ref[...] = jnp.zeros_like(acc_ref)

    acc_ref[...] += jnp.dot(
        x_ref[...], w_ref[...], preferred_element_type=jnp.float32
    )

    @pl.when(k == pl.num_programs(2) - 1)
    def _():
        # Bias added once per output tile, only in the finalize step.
        o_ref[...] = (acc_ref[...] + b_ref[...]).astype(o_ref.dtype)


# --------------------------------------------------------------------------
# Per-call forward (only x is touched per call; weight/bias are pre-prepared)
# --------------------------------------------------------------------------
@functools.partial(
    jax.jit, static_argnames=("in_feat", "out_feat", "tn", "tk", "tm_max")
)
def _lin_reg_forward(x, w_p, b_p, *, in_feat, out_feat, tn, tk, tm_max):
    """x: [B, in_feat]; w_p: [Kp, Np] (pre-padded/transposed); b_p: [1, Np]."""
    B = x.shape[0]
    assert x.shape[1] == in_feat
    Kp, Np = w_p.shape

    tm = _pick_tm(B, tm_max)
    Bp = _round_up(B, tm)

    # v7x megacore: ensure >= 2 output blocks when possible so the "parallel"
    # M/N axes can shard across both TensorCores (harmless on v5e/v6e).
    while (Bp // tm) * (Np // tn) < 2 and tn >= 256:
        tn //= 2

    grid_m, grid_n, grid_k = Bp // tm, Np // tn, Kp // tk

    # Per-call work on x only: cast to the MXU dtype, pad only if unaligned.
    # Zero padding keeps the math exact (padded K hits zero weight rows).
    x_p = x.astype(w_p.dtype)
    if Bp != B or Kp != in_feat:
        x_p = jnp.pad(x_p, ((0, Bp - B), (0, Kp - in_feat)))

    # VMEM budget: double-buffered input/output tiles + accumulator, with
    # headroom, capped well below v7x's 64 MiB/TC.
    in_item = jnp.dtype(w_p.dtype).itemsize
    out_item = jnp.dtype(x.dtype).itemsize
    vmem_need = 2 * (tm * tk * in_item + tk * tn * in_item
                     + tn * 4 + tm * tn * out_item)
    if grid_k > 1:
        vmem_need += tm * tn * 4
    vmem_limit = int(min(max(2 * vmem_need, 16 << 20), 48 << 20))

    if grid_k == 1:
        kernel = _linear_kernel_single_k
        grid = (grid_m, grid_n)
        in_specs = [
            pl.BlockSpec((tm, tk), lambda i, j: (i, 0)),   # x tile
            pl.BlockSpec((tk, tn), lambda i, j: (0, j)),   # W tile (K, N)
            pl.BlockSpec((1, tn), lambda i, j: (0, j)),    # bias tile
        ]
        out_specs = pl.BlockSpec((tm, tn), lambda i, j: (i, j))
        scratch_shapes = []
        dims = ("parallel", "parallel")
    else:
        kernel = _linear_kernel_multi_k
        grid = (grid_m, grid_n, grid_k)
        in_specs = [
            pl.BlockSpec((tm, tk), lambda i, j, k: (i, k)),
            pl.BlockSpec((tk, tn), lambda i, j, k: (k, j)),
            pl.BlockSpec((1, tn), lambda i, j, k: (0, j)),
        ]
        out_specs = pl.BlockSpec((tm, tn), lambda i, j, k: (i, j))
        scratch_shapes = [pltpu.VMEM((tm, tn), jnp.float32)]
        dims = ("parallel", "parallel", "arbitrary")

    out = pl.pallas_call(
        kernel,
        out_shape=jax.ShapeDtypeStruct((Bp, Np), x.dtype),
        grid_spec=pltpu.PrefetchScalarGridSpec(
            num_scalar_prefetch=0,
            grid=grid,
            in_specs=in_specs,
            out_specs=out_specs,
            scratch_shapes=scratch_shapes,
        ),
        compiler_params=pltpu.CompilerParams(
            dimension_semantics=dims,
            vmem_limit_bytes=vmem_limit,
        ),
    )(x_p, w_p, b_p)

    return out[:B, :out_feat]


# --------------------------------------------------------------------------
# Module wrapper: one-time weight/bias preparation (pad + transpose + cast)
# --------------------------------------------------------------------------
class LinRegPallas:
    """Pallas TPU equivalent of `lin_reg` (nn.Linear(in_feat, out_feat))."""

    def __init__(self, weight, bias, *, mxu_dtype=jnp.bfloat16,
                 tn_max=256, tk_max=512, tm_max=256):
        out_feat, in_feat = weight.shape
        assert bias.shape == (out_feat,)
        self.in_feat, self.out_feat = in_feat, out_feat
        self.tm_max = tm_max

        # Lane-dense N tile.
        self.tn = min(tn_max, _round_up(out_feat, 128))
        # Collapse K into a single tile when it fits (typical for this layer);
        # otherwise cap and loop over a K grid axis with an accumulator.
        k_aligned = _round_up(in_feat, 128)
        single_k_limit = 2048 if mxu_dtype == jnp.float32 else 4096
        self.tk = k_aligned if k_aligned <= single_k_limit else min(tk_max, k_aligned)

        Np = _round_up(out_feat, self.tn)
        Kp = _round_up(in_feat, self.tk)

        # One-time: pad + transpose to (K, N) + cast to the MXU dtype.  The
        # per-call path never rewrites the static weight in HBM again.
        self.w_p = (jnp.zeros((Kp, Np), mxu_dtype)
                    .at[:in_feat, :out_feat].set(weight.T.astype(mxu_dtype)))
        self.b_p = (jnp.zeros((1, Np), jnp.float32)
                    .at[0, :out_feat].set(bias.astype(jnp.float32)))

    def __call__(self, x):
        return _lin_reg_forward(
            x, self.w_p, self.b_p,
            in_feat=self.in_feat, out_feat=self.out_feat,
            tn=self.tn, tk=self.tk, tm_max=self.tm_max)


if __name__ == "__main__":
    # Small shapes consistent with nn.Linear(in_feat, out_feat)
    B, in_feat, out_feat = 8, 32, 16

    key = jax.random.PRNGKey(0)
    kx, kw, kb = jax.random.split(key, 3)

    x = jax.random.normal(kx, (B, in_feat), dtype=jnp.float32)
    # torch.nn.init.normal_(weight, mean=1.0, std=1.0)
    weight = 1.0 + 1.0 * jax.random.normal(kw, (out_feat, in_feat), dtype=jnp.float32)
    # torch.nn.init.normal_(bias, mean=0.5, std=1.0)
    bias = 0.5 + 1.0 * jax.random.normal(kb, (out_feat,), dtype=jnp.float32)

    y_ref = x @ weight.T + bias

    # Default bf16-MXU path (f32 accumulation) -> loosened tolerance vs f32 ref.
    model = LinRegPallas(weight, bias)
    y = model(x)
    jax.block_until_ready(y)
    assert y.shape == (B, out_feat)
    assert jnp.allclose(y, y_ref, atol=1e-1, rtol=2e-2), float(
        jnp.max(jnp.abs(y - y_ref)))

    # Exact-f32 sanity path.
    model_f32 = LinRegPallas(weight, bias, mxu_dtype=jnp.float32)
    y32 = model_f32(x)
    jax.block_until_ready(y32)
    assert jnp.allclose(y32, y_ref, atol=1e-5, rtol=1e-5)

    print("KERNEL_OK")
</pallas_src>

<mosaic_0001>
module attributes {stable_mosaic.version = 11 : i64} {
  func.func @_linear_kernel_single_k(%arg0: i32, %arg1: i32, %arg2: memref<8x128xbf16, #tpu.memory_space<vmem>>, %arg3: memref<128x128xbf16, #tpu.memory_space<vmem>>, %arg4: memref<1x128xf32, #tpu.memory_space<vmem>>, %arg5: memref<8x128xf32, #tpu.memory_space<vmem>>) attributes {dimension_semantics = [#tpu.dimension_semantics<parallel>, #tpu.dimension_semantics<parallel>], iteration_bounds = array<i64: 1, 1>, scalar_prefetch = 0 : i64, scratch_operands = 0 : i64, tpu.core_type = #tpu.core_type<tc>, window_params = [{transform_indices = @transform_0, window_bounds = array<i64: 8, 128>}, {transform_indices = @transform_1, window_bounds = array<i64: 128, 128>}, {transform_indices = @transform_2, window_bounds = array<i64: 1, 128>}, {transform_indices = @transform_3, window_bounds = array<i64: 8, 128>}]} {
    %c0 = arith.constant 0 : index
    %c0_0 = arith.constant 0 : index
    %0 = vector.load %arg2[%c0, %c0_0] : memref<8x128xbf16, #tpu.memory_space<vmem>>, vector<8x128xbf16>
    %c0_1 = arith.constant 0 : index
    %c0_2 = arith.constant 0 : index
    %1 = vector.load %arg3[%c0_1, %c0_2] : memref<128x128xbf16, #tpu.memory_space<vmem>>, vector<128x128xbf16>
    %cst = arith.constant dense<0.000000e+00> : vector<8x128xf32>
    %2 = tpu.matmul %0, %1, %cst {dimension_numbers = #tpu.dot_dimension_numbers<[1], [0], [0], [1], [0, 0, 1, 1], [], []>} : vector<8x128xbf16>, vector<128x128xbf16>, vector<8x128xf32> -> vector<8x128xf32>
    %c0_3 = arith.constant 0 : index
    %c0_4 = arith.constant 0 : index
    %3 = vector.load %arg4[%c0_3, %c0_4] : memref<1x128xf32, #tpu.memory_space<vmem>>, vector<1x128xf32>
    %4 = vector.broadcast %3 : vector<1x128xf32> to vector<8x128xf32>
    %5 = arith.addf %2, %4 : vector<8x128xf32>
    %c0_5 = arith.constant 0 : index
    %c0_6 = arith.constant 0 : index
    %6 = vector.load %arg5[%c0_5, %c0_6] : memref<8x128xf32, #tpu.memory_space<vmem>>, vector<8x128xf32>
    tpu.vector_store %arg5[%c0_5, %c0_6], %5 {strides = array<i32>} : memref<8x128xf32, #tpu.memory_space<vmem>>, vector<8x128xf32>,
    return
  }
  func.func @transform_0(%arg0: i32, %arg1: i32) -> (i32, i32) {
    %c0_i32 = arith.constant 0 : i32
    %c0_i32_0 = arith.constant 0 : i32
    return %arg0, %c0_i32 : i32, i32
  }
  func.func @transform_1(%arg0: i32, %arg1: i32) -> (i32, i32) {
    %c0_i32 = arith.constant 0 : i32
    %c0_i32_0 = arith.constant 0 : i32
    return %c0_i32, %arg1 : i32, i32
  }
  func.func @transform_2(%arg0: i32, %arg1: i32) -> (i32, i32) {
    %c0_i32 = arith.constant 0 : i32
    %c0_i32_0 = arith.constant 0 : i32
    return %c0_i32, %arg1 : i32, i32
  }
  func.func @transform_3(%arg0: i32, %arg1: i32) -> (i32, i32) {
    %c0_i32 = arith.constant 0 : i32
    return %arg0, %arg1 : i32, i32
  }
}

</mosaic_0001>

<llo_original>
// kernel: _lin_reg_forward.1
$region0: #{_lin_reg_forward.1}
  #allocation0 [shape = 'u32[]', space=smem, size = 0x4, offset = 0x4, fixed_abs, tag = 'smem constant byte address 0x4 - core index']
  #allocation1 [shape = 'u32[72,128]{1,0:T(1,128)}', space=vmem, size = 0x9000, scoped, tag = 'internal scratch']
  %s0 = inlined_call_operand.vmem [shape: bf16[8,128], index: 0, kind: input, shape index: {}]
  %s1 = inlined_call_operand.hbm [shape: bf16[128,128], index: 1, kind: input, shape index: {}]
  %s2 = inlined_call_operand.vmem [shape: f32[1,128], index: 2, kind: input, shape index: {}]
  %s3 = inlined_call_operand.hbm [shape: f32[8,128], index: 3, kind: output, shape index: {}]
  %s4 = sld [smem:[#allocation0]]
  $region26: #{_lin_reg_forward.1} parent=0
    _
  %s6 = ssub.s32 1, %s4
  %s7 = scalar_select 0, %s6, %s4
  $region1: #{_lin_reg_forward.1} parent=0
    #allocation2 [shape = 'u8[32768]{0}', space=vmem, size = 0x8000, scoped, tag = 'input window, operand 1, single buffered']
    #allocation3 [shape = 's32[1]{0}', space=sflag, size = 0x4, scoped, tag = 'scoped memory for _lin_reg_forward.1']
    #allocation4 [shape = 's32[1]{0}', space=sflag, size = 0x4, scoped, tag = 'scoped memory for _lin_reg_forward.1']
    #allocation5 [shape = 'u8[4096]{0}', space=vmem, size = 0x1000, scoped, tag = 'output window, operand 0, single buffered']
    %8 = vsyncpa [#allocation3], 0
    %9 = vsyncpa [#allocation4], 0
    // Predicated region
    $region2: #{_lin_reg_forward.1} parent=1 // pred_check
      _
    $region3: #{_lin_reg_forward.1} parent=1 // pred_check_branch
      %11 = sbr.rel (0) target = $region5
    $region4: #{_lin_reg_forward.1} parent=1 // pred_region
      _
    $region5: #{_lin_reg_forward.1} parent=1 // pred_fallthru
      _
    // Predicated region
    $region6: #{_lin_reg_forward.1} parent=1 // pred_check
      _
    $region7: #{_lin_reg_forward.1} parent=1 // pred_check_branch
      %13 = sbr.rel (0) target = $region9
    $region8: #{_lin_reg_forward.1} parent=1 // pred_region
      %15 = vsyncadd [#allocation3], 0
      %s16 = sshll.u32 %s1, 4
      %s17 = int_to_ptr.hbm [resolvable:$true] %s16
      %s18 = sshll.u32 [#allocation2], 4
      %s19 = int_to_ptr.vmem [resolvable:$true] %s18
      %24 = dma.hbm_to_vmem [thread:$0]  %s17, 1024, %s19, [#allocation3], 64, 64, 4
    $region9: #{_lin_reg_forward.1} parent=1 // pred_fallthru
      _
    // Predicated region
    $region10: #{_lin_reg_forward.1} parent=1 // pred_check
      _
    $region11: #{_lin_reg_forward.1} parent=1 // pred_check_branch
      %26 = sbr.rel (0) target = $region13
    $region12: #{_lin_reg_forward.1} parent=1 // pred_region
      _
    $region13: #{_lin_reg_forward.1} parent=1 // pred_fallthru
      _
    // Predicated region
    $region14: #{_lin_reg_forward.1} parent=1 // pred_check
      _
    $region15: #{_lin_reg_forward.1} parent=1 // pred_check_branch
      %28 = sbr.rel (0) target = $region17
    $region16: #{_lin_reg_forward.1} parent=1 // pred_region
      %30 = dma.done [#allocation3], 1024
    $region17: #{_lin_reg_forward.1} parent=1 // pred_fallthru
      _
    %v31 = vld [vmem:[%s0] sm:$0xf]
    %v32 = vld [vmem:[#allocation2] sm:$0xf]
    %v33 = vld [vmem:[#allocation2 + $0x4] sm:$0xf]
    %v34 = vld [vmem:[#allocation2 + $0x8] sm:$0xf]
    %v35 = vld [vmem:[#allocation2 + $0xc] sm:$0xf]
    %v36 = vld [vmem:[#allocation2 + $0x10] sm:$0xf]
    %v37 = vld [vmem:[#allocation2 + $0x14] sm:$0xf]
    %v38 = vld [vmem:[#allocation2 + $0x18] sm:$0xf]
    %v39 = vld [vmem:[#allocation2 + $0x1c] sm:$0xf]
    %v40 = vld [vmem:[#allocation2 + $0x20] sm:$0xf]
    %v41 = vld [vmem:[#allocation2 + $0x24] sm:$0xf]
    %v42 = vld [vmem:[#allocation2 + $0x28] sm:$0xf]
    %v43 = vld [vmem:[#allocation2 + $0x2c] sm:$0xf]
    %v44 = vld [vmem:[#allocation2 + $0x30] sm:$0xf]
    %v45 = vld [vmem:[#allocation2 + $0x34] sm:$0xf]
    %v46 = vld [vmem:[#allocation2 + $0x38] sm:$0xf]
    %v47 = vld [vmem:[#allocation2 + $0x3c] sm:$0xf]
    %v48 = vld [vmem:[%s2] sm:$0x1]
    %v50 = vperm.slane %v48, 0
    %v68 = vunpack.c.l.b16 %v32
    %v69 = vunpack.c.l.b16 %v33
    %v70 = vunpack.c.l.b16 %v34
    %v71 = vunpack.c.l.b16 %v35
    %v72 = vunpack.c.l.b16 %v36
    %v73 = vunpack.c.l.b16 %v37
    %v74 = vunpack.c.l.b16 %v38
    %v75 = vunpack.c.l.b16 %v39
    %v76 = vunpack.c.l.b16 %v40
    %v77 = vunpack.c.l.b16 %v41
    %v78 = vunpack.c.l.b16 %v42
    %v79 = vunpack.c.l.b16 %v43
    %v80 = vunpack.c.l.b16 %v44
    %v81 = vunpack.c.l.b16 %v45
    %v82 = vunpack.c.l.b16 %v46
    %v83 = vunpack.c.l.b16 %v47
    %v84 = vpack.c.b16 %v69, %v68
    %v85 = vpack.c.b16 %v71, %v70
    %v86 = vpack.c.b16 %v73, %v72
    %v87 = vpack.c.b16 %v75, %v74
    %v88 = vpack.c.b16 %v77, %v76
    %v89 = vpack.c.b16 %v79, %v78
    %v90 = vpack.c.b16 %v81, %v80
    %v91 = vpack.c.b16 %v83, %v82
    %100 = vmatpush.bf16.msra.mxu0 %v91
    %101 = vmatpush.bf16.msra.mxu0 %v90
    %102 = vmatpush.bf16.msra.mxu0 %v89
    %103 = vmatpush.bf16.msra.mxu0 %v88
    %104 = vmatpush.bf16.msra.mxu0 %v87
    %105 = vmatpush.bf16.msra.mxu0 %v86
    %106 = vmatpush.bf16.msra.mxu0 %v85
    %107 = vmatpush.bf16.msra.mxu0 %v84
    %108 = vmatmul.bf16.gmra.mxu0 %v31
    %v109 = vpop.f32.mrf.mxu0
    %v110 = vadd.f32 %v50, %v109
    %v111 = vpop.f32.mrf.mxu0
    %112 = vdwg.mxu0
    %113 = vst [vmem:[#allocation5] sm:$0xff] %v110
    // Predicated region
    $region18: #{_lin_reg_forward.1} parent=1 // pred_check
      _
    $region19: #{_lin_reg_forward.1} parent=1 // pred_check_branch
      %115 = sbr.rel (0) target = $region21
    $region20: #{_lin_reg_forward.1} parent=1 // pred_region
      %117 = vsyncadd [#allocation4], 0
      %s119 = sshll.u32 [#allocation5], 4
      %s120 = int_to_ptr.vmem [resolvable:$true] %s119
      %s121 = sshll.u32 %s3, 4
      %s122 = int_to_ptr.hbm [resolvable:$true] %s121
      %124 = dma.vmem_to_hbm [thread:$0]  %s120, 128, %s122, [#allocation4]
    $region21: #{_lin_reg_forward.1} parent=1 // pred_fallthru
      _
    // Predicated region
    $region22: #{_lin_reg_forward.1} parent=1 // pred_check
      _
    $region23: #{_lin_reg_forward.1} parent=1 // pred_check_branch
      %126 = sbr.rel (0) target = $region25
    $region24: #{_lin_reg_forward.1} parent=1 // pred_region
      %128 = dma.done [#allocation4], 128
    $region25: #{_lin_reg_forward.1} parent=1 // pred_fallthru
      _
    %129 = vsyncpa [#allocation3], 1
    %130 = vsyncpa [#allocation4], 1

</llo_original>
